<compile_context>
chip_gen: v5e
topology: v5e:2x2
jax: 0.10.0
libtpu: 0.0.40
codegen_flags: <defaults>
</compile_context>

<pallas_src>
import functools
import math

import jax
import jax.numpy as jnp
from jax.experimental import pallas as pl
from jax.experimental.pallas import tpu as pltpu


_LANE = 128
_TILE_BYTES = 4 * 1024 * 1024      # target bytes per VMEM block (per buffer)
_VMEM_LIMIT = 48 * 1024 * 1024     # explicit scoped-VMEM limit (safe on v5e/v6e/v7x)
_SPLIT_BYTES = 1 * 1024 * 1024     # inputs >= this get >=2 grid steps (v7x megacore)

_TRANSCENDENTAL = ("sigmoid", "tanh", "gelu", "elu")


def _round_up(a, b):
    return -(-a // b) * b


def _round_down(a, b):
    return (a // b) * b


def _act_kernel(x_ref, o_ref, *, act_type, negative_slope):
    """Elementwise activation on one VMEM block."""
    x = x_ref[...]

    if act_type == "none":
        y = x
    elif act_type == "relu":
        # dtype-native (bf16 stays bf16 on v6e/v7x; Mosaic widens on v5e).
        y = jnp.maximum(x, 0)
    elif act_type == "lrelu":
        y = jnp.where(x >= 0, x, negative_slope * x)
    elif act_type == "rrelu":
        # TODO(synk): nn.RReLU samples a random slope per element in training
        # mode; this implements the deterministic eval-mode slope (l+u)/2.
        slope = (1.0 / 8.0 + 1.0 / 3.0) / 2.0
        y = jnp.where(x >= 0, x, slope * x)
    elif act_type == "sigmoid":
        xf = x.astype(jnp.float32)
        # exp and the approximate reciprocal both run on the EUP slot
        # (max abs error vs an exact divide ~1e-4).
        y = pl.reciprocal(1.0 + jnp.exp(-xf), approx=True)
    elif act_type == "tanh":
        y = jnp.tanh(x.astype(jnp.float32))
    elif act_type == "gelu":
        # TODO(synk): nn.GELU() default is the exact erf form; the tanh
        # approximation (max abs diff ~1e-3) is used for a clean EUP lowering.
        xf = x.astype(jnp.float32)
        c = math.sqrt(2.0 / math.pi)
        y = 0.5 * xf * (1.0 + jnp.tanh(c * (xf + 0.044715 * xf * xf * xf)))
    elif act_type == "elu":
        # alpha = 1.0 (PyTorch default); clamp exp arg so the dead branch is finite.
        xf = x.astype(jnp.float32)
        y = jnp.where(xf > 0.0, xf, jnp.exp(jnp.minimum(xf, 0.0)) - 1.0)
    else:
        raise NotImplementedError(f"act_type {act_type} is not implemented")

    o_ref[...] = y.astype(o_ref.dtype)


def _choose_block_rows(rows, row_bytes, sub):
    """Row-block size: multiple of `sub` (or == rows), <= _TILE_BYTES, and split
    into >= 2 grid steps for large inputs so v7x can use both TensorCores."""
    cap = max(sub, _round_down(max(_TILE_BYTES // max(row_bytes, 1), 1), sub))
    block = min(rows, cap)
    if block == rows and rows > 2 * sub and rows * row_bytes >= _SPLIT_BYTES:
        block = _round_up(pl.cdiv(rows, 2), sub)   # < rows whenever rows > 2*sub
    return block


def activation_layer_forward(x, act_type="relu", negative_slope=0.2):
    """ActivationLayer(act_type, negative_slope=...).forward(x), any shape/dtype."""
    if act_type == "none":
        return x                                    # NoneLayer: identity

    orig_shape = x.shape
    orig_dtype = x.dtype
    total = int(math.prod(orig_shape)) if orig_shape else 1
    if total == 0:
        return x

    itemsize = jnp.dtype(orig_dtype).itemsize
    sub = 8 * max(1, 4 // max(itemsize, 1))         # 8 f32 / 16 bf16 / 32 int8-fp8

    if total % _LANE == 0:
        # Lane-dense fast path: free reshape, every full block stored unmasked.
        lanes = _LANE
        rows = total // _LANE
    else:
        # Ragged path: collapse trailing dims into the lane axis (free reshape),
        # no pad / slice HBM round trips; boundary blocks get masked stores.
        budget_lanes = max(1, (2 * _TILE_BYTES) // (itemsize * sub))
        lanes = 1
        k = len(orig_shape)
        while k > 0 and lanes * orig_shape[k - 1] <= budget_lanes:
            k -= 1
            lanes *= orig_shape[k]
        if lanes == 1:
            # TODO(synk): pathologically wide ragged trailing dim; fall back to a
            # padded lane-dense pass (extra pad+slice HBM traffic, rare case).
            padded = _round_up(total, _LANE)
            flat = jnp.pad(x.reshape(-1), (0, padded - total))
            out = activation_layer_forward(
                flat, act_type=act_type, negative_slope=negative_slope)
            return out[:total].reshape(orig_shape)
        rows = total // lanes

    x2 = x.reshape(rows, lanes)
    block_rows = _choose_block_rows(rows, lanes * itemsize, sub)
    grid = (pl.cdiv(rows, block_rows),)

    kernel = functools.partial(
        _act_kernel, act_type=act_type, negative_slope=negative_slope)

    cost = pl.CostEstimate(
        flops=(8 if act_type == "gelu" else 2) * total,
        transcendentals=total if act_type in _TRANSCENDENTAL else 0,
        bytes_accessed=2 * total * itemsize,
    )

    out2 = pl.pallas_call(
        kernel,
        out_shape=jax.ShapeDtypeStruct((rows, lanes), orig_dtype),
        grid_spec=pltpu.PrefetchScalarGridSpec(
            num_scalar_prefetch=0,
            grid=grid,
            in_specs=[pl.BlockSpec((block_rows, lanes), lambda i: (i, 0))],
            out_specs=pl.BlockSpec((block_rows, lanes), lambda i: (i, 0)),
        ),
        compiler_params=pltpu.CompilerParams(
            dimension_semantics=("parallel",),
            vmem_limit_bytes=_VMEM_LIMIT,
        ),
        cost_estimate=cost,
    )(x2)

    return out2.reshape(orig_shape)


if __name__ == "__main__":
    key = jax.random.PRNGKey(0)
    x = jax.random.normal(key, (2, 4, 16, 16), dtype=jnp.float32)

    _c = math.sqrt(2.0 / math.pi)
    refs = {
        "none": lambda v: v,
        "relu": lambda v: jnp.maximum(v, 0.0),
        "lrelu": lambda v: jnp.where(v >= 0.0, v, 0.2 * v),
        "rrelu": lambda v: jnp.where(v >= 0.0, v, ((1 / 8 + 1 / 3) / 2) * v),
        "sigmoid": lambda v: 1.0 / (1.0 + jnp.exp(-v)),
        "tanh": jnp.tanh,
        "gelu": lambda v: 0.5 * v * (1.0 + jnp.tanh(_c * (v + 0.044715 * v ** 3))),
        "elu": lambda v: jnp.where(v > 0.0, v, jnp.exp(jnp.minimum(v, 0.0)) - 1.0),
    }
    # sigmoid uses the approximate EUP reciprocal (max abs err ~1e-4 vs exact divide)
    tols = {"sigmoid": 5e-3}

    # Main run: ActivationLayer('relu') -- the common default in this codebase.
    out = jax.block_until_ready(activation_layer_forward(x, act_type="relu"))
    assert out.shape == x.shape and out.dtype == x.dtype
    assert jnp.allclose(out, refs["relu"](x), atol=1e-5, rtol=1e-5)

    # Verify every supported act_type against its reference.
    for act, ref_fn in refs.items():
        y = jax.block_until_ready(activation_layer_forward(x, act_type=act))
        tol = tols.get(act, 1e-5)
        assert jnp.allclose(y, ref_fn(x), atol=tol, rtol=tol), act

    # Ragged size (numel % 128 != 0): handled in-kernel, no wrapper pad/slice.
    x_odd = jax.random.normal(jax.random.PRNGKey(1), (3, 5, 7, 11), jnp.float32)
    y_odd = jax.block_until_ready(activation_layer_forward(x_odd, act_type="lrelu"))
    assert y_odd.shape == x_odd.shape
    assert jnp.allclose(y_odd, refs["lrelu"](x_odd), atol=1e-5, rtol=1e-5)

    # bf16 path (dtype-native compute for the cheap activations).
    x_bf = x.astype(jnp.bfloat16)
    y_bf = jax.block_until_ready(activation_layer_forward(x_bf, act_type="relu"))
    assert y_bf.dtype == jnp.bfloat16
    assert jnp.allclose(y_bf.astype(jnp.float32),
                        jnp.maximum(x_bf.astype(jnp.float32), 0.0),
                        atol=1e-2, rtol=1e-2)

    print("KERNEL_OK")
</pallas_src>

<mosaic_0001>
module attributes {stable_mosaic.version = 11 : i64} {
  func.func @_act_kernel(%arg0: i32, %arg1: memref<16x128xf32, #tpu.memory_space<vmem>>, %arg2: memref<16x128xf32, #tpu.memory_space<vmem>>) attributes {dimension_semantics = [#tpu.dimension_semantics<parallel>], iteration_bounds = array<i64: 1>, scalar_prefetch = 0 : i64, scratch_operands = 0 : i64, tpu.core_type = #tpu.core_type<tc>, window_params = [{transform_indices = @transform_0, window_bounds = array<i64: 16, 128>}, {transform_indices = @transform_1, window_bounds = array<i64: 16, 128>}]} {
    %c0 = arith.constant 0 : index
    %c0_0 = arith.constant 0 : index
    %0 = vector.load %arg1[%c0, %c0_0] : memref<16x128xf32, #tpu.memory_space<vmem>>, vector<16x128xf32>
    %cst = arith.constant 0.000000e+00 : f32
    %1 = vector.broadcast %cst : f32 to vector<16x128xf32>
    %2 = arith.maximumf %0, %1 : vector<16x128xf32>
    %c0_1 = arith.constant 0 : index
    %c0_2 = arith.constant 0 : index
    %3 = vector.load %arg2[%c0_1, %c0_2] : memref<16x128xf32, #tpu.memory_space<vmem>>, vector<16x128xf32>
    tpu.vector_store %arg2[%c0_1, %c0_2], %2 {strides = array<i32>} : memref<16x128xf32, #tpu.memory_space<vmem>>, vector<16x128xf32>,
    return
  }
  func.func @transform_0(%arg0: i32) -> (i32, i32) {
    %c0_i32 = arith.constant 0 : i32
    %c0_i32_0 = arith.constant 0 : i32
    return %arg0, %c0_i32 : i32, i32
  }
  func.func @transform_1(%arg0: i32) -> (i32, i32) {
    %c0_i32 = arith.constant 0 : i32
    %c0_i32_0 = arith.constant 0 : i32
    return %arg0, %c0_i32 : i32, i32
  }
}

</mosaic_0001>

<llo_original>
// kernel: tpu_custom_call.1
$region0: #{tpu_custom_call.1}
  #allocation0 [shape = 'u32[]', space=smem, size = 0x4, offset = 0x4, fixed_abs, tag = 'smem constant byte address 0x4 - core index']
  #allocation1 [shape = 'u32[72,128]{1,0:T(1,128)}', space=vmem, size = 0x9000, scoped, tag = 'internal scratch']
  %s0 = inlined_call_operand.hbm [shape: f32[16,128], index: 0, kind: input, shape index: {}]
  %s1 = inlined_call_operand.hbm [shape: f32[16,128], index: 1, kind: output, shape index: {}]
  %s2 = sld [smem:[#allocation0]]
  $region18: #{tpu_custom_call.1} parent=0
    _
  %s4 = ssub.s32 1, %s2
  %s5 = scalar_select 0, %s4, %s2
  $region1: #{tpu_custom_call.1} parent=0
    #allocation2 [shape = 'u8[8192]{0}', space=vmem, size = 0x2000, scoped, tag = 'input window, operand 0, single buffered']
    #allocation3 [shape = 's32[1]{0}', space=sflag, size = 0x4, scoped, tag = 'scoped memory for tpu_custom_call.1']
    #allocation4 [shape = 's32[1]{0}', space=sflag, size = 0x4, scoped, tag = 'scoped memory for tpu_custom_call.1']
    #allocation5 [shape = 'u8[8192]{0}', space=vmem, size = 0x2000, scoped, tag = 'output window, operand 0, single buffered']
    %6 = vsyncpa [#allocation3], 0
    %7 = vsyncpa [#allocation4], 0
    // Predicated region
    $region2: #{tpu_custom_call.1} parent=1 // pred_check
      _
    $region3: #{tpu_custom_call.1} parent=1 // pred_check_branch
      %9 = sbr.rel (0) target = $region5
    $region4: #{tpu_custom_call.1} parent=1 // pred_region
      %11 = vsyncadd [#allocation3], 0
      %s12 = sshll.u32 %s0, 4
      %s13 = int_to_ptr.hbm [resolvable:$true] %s12
      %s14 = sshll.u32 [#allocation2], 4
      %s15 = int_to_ptr.vmem [resolvable:$true] %s14
      %20 = dma.hbm_to_vmem [thread:$0]  %s13, 256, %s15, [#allocation3], 128, 128, 8
    $region5: #{tpu_custom_call.1} parent=1 // pred_fallthru
      _
    // Predicated region
    $region6: #{tpu_custom_call.1} parent=1 // pred_check
      _
    $region7: #{tpu_custom_call.1} parent=1 // pred_check_branch
      %22 = sbr.rel (0) target = $region9
    $region8: #{tpu_custom_call.1} parent=1 // pred_region
      %24 = dma.done [#allocation3], 256
    $region9: #{tpu_custom_call.1} parent=1 // pred_fallthru
      _
    %v25 = vld [vmem:[#allocation2] sm:$0xff]
    %v26 = vld [vmem:[#allocation2 + $0x8] sm:$0xff]
    %v27 = vmax.f32 %v25, 0.0
    %v28 = vmax.f32 %v26, 0.0
    %29 = vst [vmem:[#allocation5] sm:$0xff] %v27
    %30 = vst [vmem:[#allocation5 + $0x8] sm:$0xff] %v28
    // Predicated region
    $region10: #{tpu_custom_call.1} parent=1 // pred_check
      _
    $region11: #{tpu_custom_call.1} parent=1 // pred_check_branch
      %32 = sbr.rel (0) target = $region13
    $region12: #{tpu_custom_call.1} parent=1 // pred_region
      %34 = vsyncadd [#allocation4], 0
      %s35 = sshll.u32 [#allocation5], 4
      %s36 = int_to_ptr.vmem [resolvable:$true] %s35
      %s37 = sshll.u32 %s1, 4
      %s38 = int_to_ptr.hbm [resolvable:$true] %s37
      %43 = dma.vmem_to_hbm [thread:$0]  %s36, 256, %s38, [#allocation4], 128, 128, 8
    $region13: #{tpu_custom_call.1} parent=1 // pred_fallthru
      _
    // Predicated region
    $region14: #{tpu_custom_call.1} parent=1 // pred_check
      _
    $region15: #{tpu_custom_call.1} parent=1 // pred_check_branch
      %45 = sbr.rel (0) target = $region17
    $region16: #{tpu_custom_call.1} parent=1 // pred_region
      %47 = dma.done [#allocation4], 256
    $region17: #{tpu_custom_call.1} parent=1 // pred_fallthru
      _
    %48 = vsyncpa [#allocation3], 1
    %49 = vsyncpa [#allocation4], 1

</llo_original>
